<compile_context>
chip_gen: v5e
topology: v5e:2x2
jax: 0.10.0
libtpu: 0.0.40
codegen_flags: <defaults>
</compile_context>

<pallas_src>
import functools

import jax
import jax.numpy as jnp
from jax import lax
from jax.experimental import pallas as pl
from jax.experimental.pallas import tpu as pltpu


def _focal_loss_kernel(x_ref, tgt_ref, out_ref, *, gamma, alpha, n_total,
                       tile_rows):
    i = pl.program_id(0)

    x = x_ref[...].astype(jnp.float32)          # (TN, C) logits
    tgt = tgt_ref[...]                          # (TN, 1) int32 class indices
    tn, c = x.shape

    # ---- numerically stable log-softmax pieces (no full log_p materialized) --
    m = jnp.max(x, axis=1, keepdims=True)                        # (TN, 1)
    z = x - m                                                    # (TN, C)
    lse = jnp.log(jnp.sum(jnp.exp(z), axis=1, keepdims=True))    # (TN, 1)

    # ---- gather z at the target class via masked one-hot select (exact) -----
    col = lax.broadcasted_iota(jnp.int32, (tn, c), 1)
    onehot = col == tgt                                          # (TN, C) bool
    z_t = jnp.sum(jnp.where(onehot, z, 0.0), axis=1, keepdims=True)  # (TN, 1)

    logpt = z_t - lse                                            # (TN, 1)
    pt = jnp.exp(logpt)

    # ---- alpha weighting: alpha if target > 0 else (1 - alpha) --------------
    w = jnp.where(tgt > 0, jnp.float32(alpha), jnp.float32(1.0 - alpha))
    logpt_w = logpt * w

    # ---- focal modulation (1 - pt)**gamma (gamma is a compile-time const) ---
    if gamma == 0.0:
        loss = -logpt_w
    else:
        one_minus_pt = 1.0 - pt
        if float(gamma).is_integer() and 0 < gamma <= 8:
            mod = lax.integer_pow(one_minus_pt, int(gamma))
        else:
            mod = jnp.power(one_minus_pt, jnp.float32(gamma))
        loss = -mod * logpt_w                                    # (TN, 1)

    # ---- mask rows past the true batch size (last, partially filled tile) ---
    row = i * tile_rows + lax.broadcasted_iota(jnp.int32, (tn, 1), 0)
    loss = jnp.where(row < n_total, loss, 0.0)

    # ---- per-tile partial sum, written to a lane-dense (1, 8, 128) block ----
    partial = jnp.sum(loss)
    out_ref[...] = jnp.broadcast_to(partial, out_ref.shape).astype(out_ref.dtype)


def focal_loss(x, target, *, gamma=0.0, alpha=0.25, size_average=True,
               tile_rows=512):
    """Pallas implementation of FocalLoss.forward.

    x:      (N, C) float logits
    target: (N,)   int class indices
    gamma, alpha, size_average: as in the PyTorch module (alpha must be a
    number, same as required for the torch code to run).

    Note: for very small problems the fixed pallas_call overhead dominates and
    a pure-jnp path would be faster; this script always runs the kernel.
    """
    if x.ndim != 2:
        raise ValueError('Only 2 dimension tensors are implemented '
                         '(got {})'.format(x.shape))
    n, c = x.shape
    target = jnp.reshape(target, (-1,)).astype(jnp.int32)
    if target.shape[0] != n:
        raise ValueError('Expected input batchsize ({}) to match target '
                         'batch_size ({})'.format(n, target.shape[0]))

    # Row tile: multiple of 8 (sublane) unless the whole batch fits in one tile.
    tile_rows = max(8, (int(tile_rows) // 8) * 8)
    tn = n if n <= tile_rows else tile_rows
    grid = pl.cdiv(n, tn)

    tgt2d = target.reshape(n, 1)

    kernel = functools.partial(
        _focal_loss_kernel,
        gamma=float(gamma), alpha=float(alpha),
        n_total=n, tile_rows=tn)

    partials = pl.pallas_call(
        kernel,
        out_shape=jax.ShapeDtypeStruct((grid, 8, 128), jnp.float32),
        grid=(grid,),
        in_specs=[
            pl.BlockSpec((tn, c), lambda i: (i, 0)),   # logits tile
            pl.BlockSpec((tn, 1), lambda i: (i, 0)),   # target tile
        ],
        out_specs=pl.BlockSpec((1, 8, 128), lambda i: (i, 0, 0)),
        compiler_params=pltpu.CompilerParams(
            dimension_semantics=("parallel",),          # megacore on v7x
            vmem_limit_bytes=32 * 1024 * 1024,
        ),
    )(x, tgt2d)

    total = jnp.sum(partials[:, 0, 0])                  # grid-sized reduction
    if size_average:
        return total / jnp.float32(n)
    return total


def _reference(x, target, gamma, alpha, size_average):
    logp = jax.nn.log_softmax(x.astype(jnp.float32), axis=1)
    logpt = jnp.take_along_axis(
        logp, target.reshape(-1, 1).astype(jnp.int32), axis=1)[:, 0]
    pt = jnp.exp(logpt)
    logpt_w = (logpt * alpha * (target > 0).astype(jnp.float32)
               + logpt * (1.0 - alpha) * (target <= 0).astype(jnp.float32))
    loss = -((1.0 - pt) ** gamma) * logpt_w
    return jnp.mean(loss) if size_average else jnp.sum(loss)


if __name__ == "__main__":
    key = jax.random.PRNGKey(0)
    # relation-head-ish sizes: N relation proposals, C relation classes.
    N, C = 300, 51

    k_x, k_t = jax.random.split(key)
    x = jax.random.normal(k_x, (N, C), dtype=jnp.float32)
    target = jax.random.randint(k_t, (N,), 0, C, dtype=jnp.int32)

    gamma, alpha = 2.0, 0.25

    # mean (size_average=True) — tile_rows=128 so the grid (=3) and the
    # ragged-last-tile masking are actually exercised.
    loss_mean = jax.block_until_ready(
        focal_loss(x, target, gamma=gamma, alpha=alpha,
                   size_average=True, tile_rows=128))
    ref_mean = _reference(x, target, gamma, alpha, True)
    assert jnp.allclose(loss_mean, ref_mean, atol=1e-5, rtol=1e-5), (
        loss_mean, ref_mean)

    # sum (size_average=False)
    loss_sum = jax.block_until_ready(
        focal_loss(x, target, gamma=gamma, alpha=alpha,
                   size_average=False, tile_rows=128))
    ref_sum = _reference(x, target, gamma, alpha, False)
    assert jnp.allclose(loss_sum, ref_sum, atol=1e-4, rtol=1e-5), (
        loss_sum, ref_sum)

    # module-default gamma=0 path (plain alpha-weighted CE)
    loss_g0 = jax.block_until_ready(
        focal_loss(x, target, gamma=0.0, alpha=0.5,
                   size_average=True, tile_rows=128))
    ref_g0 = _reference(x, target, 0.0, 0.5, True)
    assert jnp.allclose(loss_g0, ref_g0, atol=1e-5, rtol=1e-5), (
        loss_g0, ref_g0)

    print("KERNEL_OK")
</pallas_src>

<mosaic_0001>
module attributes {stable_mosaic.version = 11 : i64} {
  func.func @_focal_loss_kernel(%arg0: i32, %arg1: memref<128x51xf32, #tpu.memory_space<vmem>>, %arg2: memref<128x1xi32, #tpu.memory_space<vmem>>, %arg3: memref<1x8x128xf32, #tpu.memory_space<vmem>>) attributes {dimension_semantics = [#tpu.dimension_semantics<parallel>], iteration_bounds = array<i64: 3>, scalar_prefetch = 0 : i64, scratch_operands = 0 : i64, tpu.core_type = #tpu.core_type<tc>, window_params = [{transform_indices = @transform_0, window_bounds = array<i64: 128, 51>}, {transform_indices = @transform_1, window_bounds = array<i64: 128, 1>}, {transform_indices = @transform_2, window_bounds = array<i64: 1, 8, 128>}]} {
    %c0 = arith.constant 0 : index
    %c0_0 = arith.constant 0 : index
    %0 = vector.load %arg1[%c0, %c0_0] : memref<128x51xf32, #tpu.memory_space<vmem>>, vector<128x51xf32>
    %c0_1 = arith.constant 0 : index
    %c0_2 = arith.constant 0 : index
    %1 = vector.load %arg2[%c0_1, %c0_2] : memref<128x1xi32, #tpu.memory_space<vmem>>, vector<128x1xi32>
    %cst = arith.constant dense<0xFF800000> : vector<128xf32>
    %2 = vector.multi_reduction <maximumf>, %0, %cst [1] : vector<128x51xf32> to vector<128xf32>
    %3 = vector.shape_cast %2 : vector<128xf32> to vector<128x1xf32>
    %4 = vector.broadcast %3 : vector<128x1xf32> to vector<128x51xf32>
    %5 = arith.subf %0, %4 : vector<128x51xf32>
    %6 = math.exp %5 : vector<128x51xf32>
    %cst_3 = arith.constant dense<0.000000e+00> : vector<128xf32>
    %7 = vector.multi_reduction <add>, %6, %cst_3 [1] : vector<128x51xf32> to vector<128xf32>
    %8 = vector.shape_cast %7 : vector<128xf32> to vector<128x1xf32>
    %9 = math.log %8 : vector<128x1xf32>
    %10 = tpu.iota {dimensions = array<i32: 1>} : vector<128x51xi32>
    %11 = vector.broadcast %1 : vector<128x1xi32> to vector<128x51xi32>
    %12 = arith.cmpi eq, %10, %11 : vector<128x51xi32>
    %cst_4 = arith.constant 0.000000e+00 : f32
    %13 = vector.broadcast %cst_4 : f32 to vector<128x51xf32>
    %14 = arith.select %12, %5, %13 : vector<128x51xi1>, vector<128x51xf32>
    %cst_5 = arith.constant dense<0.000000e+00> : vector<128xf32>
    %15 = vector.multi_reduction <add>, %14, %cst_5 [1] : vector<128x51xf32> to vector<128xf32>
    %16 = vector.shape_cast %15 : vector<128xf32> to vector<128x1xf32>
    %17 = arith.subf %16, %9 : vector<128x1xf32>
    %18 = math.exp %17 : vector<128x1xf32>
    %c0_i32 = arith.constant 0 : i32
    %19 = vector.broadcast %c0_i32 : i32 to vector<128x1xi32>
    %20 = arith.cmpi sgt, %1, %19 : vector<128x1xi32>
    %cst_6 = arith.constant 2.500000e-01 : f32
    %cst_7 = arith.constant 7.500000e-01 : f32
    %21 = vector.broadcast %cst_6 : f32 to vector<128x1xf32>
    %22 = vector.broadcast %cst_7 : f32 to vector<128x1xf32>
    %23 = arith.select %20, %21, %22 : vector<128x1xi1>, vector<128x1xf32>
    %24 = arith.mulf %17, %23 : vector<128x1xf32>
    %cst_8 = arith.constant 1.000000e+00 : f32
    %25 = vector.broadcast %cst_8 : f32 to vector<128x1xf32>
    %26 = arith.subf %25, %18 : vector<128x1xf32>
    %27 = arith.mulf %26, %26 : vector<128x1xf32>
    %cst_9 = arith.constant 0.000000e+00 : f32
    %28 = vector.broadcast %cst_9 : f32 to vector<128x1xf32>
    %29 = arith.subf %28, %27 : vector<128x1xf32>
    %30 = arith.mulf %29, %24 : vector<128x1xf32>
    %c128_i32 = arith.constant 128 : i32
    %31 = arith.muli %arg0, %c128_i32 : i32
    %32 = tpu.iota {dimensions = array<i32: 0>} : vector<128x1xi32>
    %33 = vector.broadcast %31 : i32 to vector<128x1xi32>
    %34 = arith.addi %33, %32 : vector<128x1xi32>
    %c300_i32 = arith.constant 300 : i32
    %35 = vector.broadcast %c300_i32 : i32 to vector<128x1xi32>
    %36 = arith.cmpi slt, %34, %35 : vector<128x1xi32>
    %cst_10 = arith.constant 0.000000e+00 : f32
    %37 = vector.broadcast %cst_10 : f32 to vector<128x1xf32>
    %38 = arith.select %36, %30, %37 : vector<128x1xi1>, vector<128x1xf32>
    %39 = vector.shape_cast %38 : vector<128x1xf32> to vector<1x128x1xf32>
    %cst_11 = arith.constant dense<0.000000e+00> : vector<1xf32>
    %40 = vector.multi_reduction <add>, %39, %cst_11 [1, 2] : vector<1x128x1xf32> to vector<1xf32>
    %41 = vector.shape_cast %40 : vector<1xf32> to vector<1x1x1xf32>
    %42 = vector.extract %41[0, 0, 0] : f32 from vector<1x1x1xf32>
    %43 = vector.broadcast %42 : f32 to vector<1x8x128xf32>
    %c0_12 = arith.constant 0 : index
    %c0_13 = arith.constant 0 : index
    %c0_14 = arith.constant 0 : index
    %44 = vector.load %arg3[%c0_12, %c0_13, %c0_14] : memref<1x8x128xf32, #tpu.memory_space<vmem>>, vector<1x8x128xf32>
    tpu.vector_store %arg3[%c0_12, %c0_13, %c0_14], %43 {strides = array<i32>} : memref<1x8x128xf32, #tpu.memory_space<vmem>>, vector<1x8x128xf32>,
    return
  }
  func.func @transform_0(%arg0: i32) -> (i32, i32) {
    %c0_i32 = arith.constant 0 : i32
    %c0_i32_0 = arith.constant 0 : i32
    return %arg0, %c0_i32 : i32, i32
  }
  func.func @transform_1(%arg0: i32) -> (i32, i32) {
    %c0_i32 = arith.constant 0 : i32
    %c0_i32_0 = arith.constant 0 : i32
    return %arg0, %c0_i32 : i32, i32
  }
  func.func @transform_2(%arg0: i32) -> (i32, i32, i32) {
    %c0_i32 = arith.constant 0 : i32
    %c0_i32_0 = arith.constant 0 : i32
    %c0_i32_1 = arith.constant 0 : i32
    return %arg0, %c0_i32, %c0_i32_0 : i32, i32, i32
  }
}

</mosaic_0001>

<llo_original>
// kernel: tpu_custom_call.1
$region0: #{tpu_custom_call.1}
  #allocation0 [shape = 'u32[]', space=smem, size = 0x4, offset = 0x4, fixed_abs, tag = 'smem constant byte address 0x4 - core index']
  #allocation1 [shape = 'u32[72,128]{1,0:T(1,128)}', space=vmem, size = 0x9000, scoped, tag = 'internal scratch']
  %s0 = inlined_call_operand.vmem [shape: f32[300,51], index: 0, kind: input, shape index: {}]
  %s1 = inlined_call_operand.vmem [shape: s32[300,1], index: 1, kind: input, shape index: {}]
  %s2 = inlined_call_operand.hbm [shape: f32[3,8,128], index: 2, kind: output, shape index: {}]
  %s3 = sld [smem:[#allocation0]]
  $region41: #{tpu_custom_call.1} parent=0
    _
  %s5 = ssub.s32 1, %s3
  %s6 = scalar_select 0, %s5, %s3
  $region1: #{tpu_custom_call.1} parent=0
    #allocation2 [shape = 'u8[8192]{0}', space=vmem, size = 0x2000, scoped, tag = 'output window, operand 0']
    #allocation3 [shape = 's32[2]{0}', space=sflag, size = 0x8, scoped, tag = 'scoped memory for tpu_custom_call.1']
    %7 = vsyncpa [#allocation3], 0
    %s8 = scalar_lea.sflag [#allocation3], 1
    %9 = vsyncpa %s8, 0
    loop: start=0, step=1, limit=5
    $region2: #{tpu_custom_call.1} parent=1 // loop_pre_header
      _
    $region3: #{tpu_custom_call.1} parent=1 // loop_header
      %s11 = sphi 0, %s15
      %p12 = scmp.ge.s32.totalorder %s11, 5
      %s21 = sphi 0, %s23
      %s24 = sphi 0, %s21
      %s25 = sphi 0, %s24
      %s41 = sphi 0, %s25
      %s47 = sphi 0, %s49
      %s50 = sphi 0, %s47
      %s51 = sphi 0, %s50
      %s67 = sphi 0, %s51
      %s73 = sphi 0, %s75
      %s76 = sphi 0, %s73
      %s77 = sphi 0, %s76
      %s93 = sphi 0, %s77
    $region4: #{tpu_custom_call.1} parent=1 // loop_header_branch
      %14 = sbr.rel (%p12) target = $region8
    $region5: #{tpu_custom_call.1} parent=1 // loop_body
      %s16 = ssub.s32 %s11, 1
      %s17 = ssub.s32 %s11, 2
      %s18 = sadd.s32 %s11, 1
      %s19 = ssub.s32 %s11, %s18
      %p20 = scmp.eq.s32.totalorder %s19, 0
      %s22 = sadd.s32 %s21, 1
      %s23 = scalar_select %p20, %s21, %s22
      %p26 = pneg %p20
      %p27 = scmp.eq.s32.totalorder %s11, 2
      %p28 = por %p26, %p27
      %p29 = scmp.ne.s32.totalorder %s21, %s24
      %p30 = scmp.eq.s32.totalorder %s11, 0
      %p31 = por %p29, %p30
      %p32 = scmp.ne.s32.totalorder %s21, %s24
      %p33 = scmp.eq.s32.totalorder %s16, 2
      %p34 = por %p32, %p33
      %p35 = scmp.ne.s32.totalorder %s24, %s25
      %p36 = scmp.eq.s32.totalorder %s16, 0
      %p37 = por %p35, %p36
      %p38 = scmp.ne.s32.totalorder %s24, %s25
      %p39 = scmp.eq.s32.totalorder %s17, 2
      %p40 = por %p38, %p39
      %p42 = scmp.ne.s32.totalorder %s25, %s41
      %p43 = scmp.eq.s32.totalorder %s17, 0
      %p44 = por %p42, %p43
      %s45 = ssub.s32 %s11, %s18
      %p46 = scmp.eq.s32.totalorder %s45, 0
      %s48 = sadd.s32 %s47, 1
      %s49 = scalar_select %p46, %s47, %s48
      %p52 = pneg %p46
      %p53 = scmp.eq.s32.totalorder %s11, 2
      %p54 = por %p52, %p53
      %p55 = scmp.ne.s32.totalorder %s47, %s50
      %p56 = scmp.eq.s32.totalorder %s11, 0
      %p57 = por %p55, %p56
      %p58 = scmp.ne.s32.totalorder %s47, %s50
      %p59 = scmp.eq.s32.totalorder %s16, 2
      %p60 = por %p58, %p59
      %p61 = scmp.ne.s32.totalorder %s50, %s51
      %p62 = scmp.eq.s32.totalorder %s16, 0
      %p63 = por %p61, %p62
      %p64 = scmp.ne.s32.totalorder %s50, %s51
      %p65 = scmp.eq.s32.totalorder %s17, 2
      %p66 = por %p64, %p65
      %p68 = scmp.ne.s32.totalorder %s51, %s67
      %p69 = scmp.eq.s32.totalorder %s17, 0
      %p70 = por %p68, %p69
      %s71 = ssub.s32 %s11, %s18
      %p72 = scmp.eq.s32.totalorder %s71, 0
      %s74 = sadd.s32 %s73, 1
      %s75 = scalar_select %p72, %s73, %s74
      %p78 = pneg %p72
      %p79 = scmp.eq.s32.totalorder %s11, 2
      %p80 = por %p78, %p79
      %p81 = scmp.ne.s32.totalorder %s73, %s76
      %p82 = scmp.eq.s32.totalorder %s11, 0
      %p83 = por %p81, %p82
      %p84 = scmp.ne.s32.totalorder %s73, %s76
      %p85 = scmp.eq.s32.totalorder %s16, 2
      %p86 = por %p84, %p85
      %p87 = scmp.ne.s32.totalorder %s76, %s77
      %p88 = scmp.eq.s32.totalorder %s16, 0
      %p89 = por %p87, %p88
      %p90 = scmp.ne.s32.totalorder %s76, %s77
      %p91 = scmp.eq.s32.totalorder %s17, 2
      %p92 = por %p90, %p91
      %p94 = scmp.ne.s32.totalorder %s77, %s93
      %p95 = scmp.eq.s32.totalorder %s17, 0
      %p96 = por %p94, %p95
      %p97 = scmp.le.s32.totalorder 1, %s11
      %p98 = scmp.lt.s32.totalorder %s11, 4
      %p99 = pnand %p97, %p98
      %p100 = pneg %p99
      // Predicated region
      $region9: #{tpu_custom_call.1} parent=5 // pred_check
        _
      $region10: #{tpu_custom_call.1} parent=5 // pred_check_branch
        %102 = sbr.rel (%p99) target = $region12
      $region11: #{tpu_custom_call.1} parent=5 // pred_region
        %s103 = ssub.s32 %s11, 1
      $region12: #{tpu_custom_call.1} parent=5 // pred_fallthru
        _
      %p104 = scmp.lt.s32.totalorder %s11, 3
      // Predicated region
      $region13: #{tpu_custom_call.1} parent=5 // pred_check
        %p105 = pneg %p104
      $region14: #{tpu_custom_call.1} parent=5 // pred_check_branch
        %107 = sbr.rel (%p105) target = $region16
      $region15: #{tpu_custom_call.1} parent=5 // pred_region
        // Predicated region
        $region17: #{tpu_custom_call.1} parent=15 // pred_check
          %p108 = pneg %p31
        $region18: #{tpu_custom_call.1} parent=15 // pred_check_branch
          %110 = sbr.rel (%p108) target = $region20
        $region19: #{tpu_custom_call.1} parent=15 // pred_region
          %s111 = smul.u32 16, %s11
          %s112 = ssub.s32 38, %s111
          %p113 = scmp.lt.s32.totalorder %s112, 16
          %s114 = scalar_select %p113, %s112, 16
          %s115 = smul.u32 8, %s114
          %p116 = scmp.lt.s32.totalorder %s111, 37
          %s117 = scalar_select %p116, %s111, 37
          %s118 = smul.addr %s117, 8
          %s119 = scalar_lea.vmem %s0, %s118
          %s120 = smul.u32 16, %s11
          %s121 = ssub.s32 38, %s120
          %p122 = scmp.lt.s32.totalorder %s121, 16
          %s123 = scalar_select %p122, %s121, 16
          %s124 = smul.u32 8, %s123
        $region20: #{tpu_custom_call.1} parent=15 // pred_fallthru
          _
        // Predicated region
        $region21: #{tpu_custom_call.1} parent=15 // pred_check
          %p125 = pneg %p57
        $region22: #{tpu_custom_call.1} parent=15 // pred_check_branch
          %127 = sbr.rel (%p125) target = $region24
        $region23: #{tpu_custom_call.1} parent=15 // pred_region
          %s128 = smul.u32 16, %s11
          %s129 = ssub.s32 38, %s128
          %p130 = scmp.lt.s32.totalorder %s129, 16
          %s131 = scalar_select %p130, %s129, 16
          %s132 = smul.u32 8, %s131
          %p133 = scmp.lt.s32.totalorder %s128, 37
          %s134 = scalar_select %p133, %s128, 37
          %s135 = smul.addr %s134, 8
          %s136 = scalar_lea.vmem %s1, %s135
          %s137 = smul.u32 16, %s11
          %s138 = ssub.s32 38, %s137
          %p139 = scmp.lt.s32.totalorder %s138, 16
          %s140 = scalar_select %p139, %s138, 16
          %s141 = smul.u32 8, %s140
        $region24: #{tpu_custom_call.1} parent=15 // pred_fallthru
          _
      $region16: #{tpu_custom_call.1} parent=5 // pred_fallthru
        _
      %p142 = scmp.le.s32.totalorder 1, %s11
      %p143 = scmp.lt.s32.totalorder %s11, 4
      %p144 = pnand %p142, %p143
      %p145 = pneg %p144
      // Predicated region
      $region25: #{tpu_custom_call.1} parent=5 // pred_check
        _
      $region26: #{tpu_custom_call.1} parent=5 // pred_check_branch
        %147 = sbr.rel (%p144) target = $region28
      $region27: #{tpu_custom_call.1} parent=5 // pred_region
        %s148 = ssub.s32 %s11, 1
        %s149 = smul.u32 16, %s16
        %s150 = ssub.s32 38, %s149
        %p151 = scmp.lt.s32.totalorder %s150, 16
        %s152 = scalar_select %p151, %s150, 16
        %s153 = smul.u32 8, %s152
        %p154 = scmp.lt.s32.totalorder %s149, 37
        %s155 = scalar_select %p154, %s149, 37
        %s156 = smul.addr %s155, 8
        %s157 = scalar_lea.vmem %s0, %s156
        %p158 = pneg %p37
        %p159 = pneg %p34
        %s160 = smul.u32 16, %s16
        %s161 = ssub.s32 38, %s160
        %p162 = scmp.lt.s32.totalorder %s161, 16
        %s163 = scalar_select %p162, %s161, 16
        %s164 = smul.u32 8, %s163
        %p165 = scmp.lt.s32.totalorder %s160, 37
        %s166 = scalar_select %p165, %s160, 37
        %s167 = smul.addr %s166, 8
        %s168 = scalar_lea.vmem %s1, %s167
        %p169 = pneg %p63
        %p170 = pneg %p60
        %p171 = pneg %p89
        %p172 = pneg %p86
        %s173 = sand.u32 %s76, 1
        %s174 = scalar_lea.sflag [#allocation3], %s173
        %s175 = sand.u32 %s76, 1
        %s176 = smul.addr %s175, 8
        %s177 = scalar_lea.vmem [#allocation2], %s176
        %s178 = smul.u32 16, %s16
        %s179 = ssub.s32 38, %s178
        %p180 = scmp.lt.s32.totalorder %s179, 16
        %s181 = scalar_select %p180, %s179, 16
        %s182 = smul.u32 8, %s181
        %p183 = scmp.lt.s32.totalorder %s178, 37
        %s184 = scalar_select %p183, %s178, 37
        %s185 = smul.addr %s184, 8
        %s186 = scalar_lea.vmem %s0, %s185
        %s187 = smul.u32 16, %s16
        %s188 = ssub.s32 38, %s187
        %p189 = scmp.lt.s32.totalorder %s188, 16
        %s190 = scalar_select %p189, %s188, 16
        %s191 = smul.u32 8, %s190
        %s192 = smul.u32 16, %s16
        %s193 = ssub.s32 38, %s192
        %p194 = scmp.lt.s32.totalorder %s193, 16
        %s195 = scalar_select %p194, %s193, 16
        %s196 = smul.u32 8, %s195
        %p197 = scmp.lt.s32.totalorder %s192, 37
        %s198 = scalar_select %p197, %s192, 37
        %s199 = smul.addr %s198, 8
        %s200 = scalar_lea.vmem %s1, %s199
        %s201 = smul.u32 16, %s16
        %s202 = ssub.s32 38, %s201
        %p203 = scmp.lt.s32.totalorder %s202, 16
        %s204 = scalar_select %p203, %s202, 16
        %s205 = smul.u32 8, %s204
        %v206 = vld [vmem:[%s186] sm:$0xff]
        %v207 = vld [vmem:[%s186 + $0x8] sm:$0xff]
        %v208 = vld [vmem:[%s186 + $0x10] sm:$0xff]
        %v209 = vld [vmem:[%s186 + $0x18] sm:$0xff]
        %v210 = vld [vmem:[%s186 + $0x20] sm:$0xff]
        %v211 = vld [vmem:[%s186 + $0x28] sm:$0xff]
        %v212 = vld [vmem:[%s186 + $0x30] sm:$0xff]
        %v213 = vld [vmem:[%s186 + $0x38] sm:$0xff]
        %v214 = vld [vmem:[%s186 + $0x40] sm:$0xff]
        %v215 = vld [vmem:[%s186 + $0x48] sm:$0xff]
        %v216 = vld [vmem:[%s186 + $0x50] sm:$0xff]
        %v217 = vld [vmem:[%s186 + $0x58] sm:$0xff]
        %v218 = vld [vmem:[%s186 + $0x60] sm:$0xff]
        %v219 = vld [vmem:[%s186 + $0x68] sm:$0xff]
        %v220 = vld [vmem:[%s186 + $0x70] sm:$0xff]
        %v221 = vld [vmem:[%s186 + $0x78] sm:$0xff]
        %v222 = vld [vmem:[%s200] sm:$0xff]
        %v223 = vld [vmem:[%s200 + $0x8] sm:$0xff]
        %v224 = vld [vmem:[%s200 + $0x10] sm:$0xff]
        %v225 = vld [vmem:[%s200 + $0x18] sm:$0xff]
        %v226 = vld [vmem:[%s200 + $0x20] sm:$0xff]
        %v227 = vld [vmem:[%s200 + $0x28] sm:$0xff]
        %v228 = vld [vmem:[%s200 + $0x30] sm:$0xff]
        %v229 = vld [vmem:[%s200 + $0x38] sm:$0xff]
        %v230 = vld [vmem:[%s200 + $0x40] sm:$0xff]
        %v231 = vld [vmem:[%s200 + $0x48] sm:$0xff]
        %v232 = vld [vmem:[%s200 + $0x50] sm:$0xff]
        %v233 = vld [vmem:[%s200 + $0x58] sm:$0xff]
        %v234 = vld [vmem:[%s200 + $0x60] sm:$0xff]
        %v235 = vld [vmem:[%s200 + $0x68] sm:$0xff]
        %v236 = vld [vmem:[%s200 + $0x70] sm:$0xff]
        %v237 = vld [vmem:[%s200 + $0x78] sm:$0xff]
        %vm238 = vcmask 416768
        %v239 = vsel %vm238, %v206, -inf
        %240 = vmax.xlane.f32.xlu0 %v239
        %v241 = vpop.xlane.xlu0 %240
        %v242 = vsel %vm238, %v207, -inf
        %243 = vmax.xlane.f32.xlu0 %v242
        %v244 = vpop.xlane.xlu0 %243
        %v245 = vsel %vm238, %v208, -inf
        %246 = vmax.xlane.f32.xlu0 %v245
        %v247 = vpop.xlane.xlu0 %246
        %v248 = vsel %vm238, %v209, -inf
        %249 = vmax.xlane.f32.xlu0 %v248
        %v250 = vpop.xlane.xlu0 %249
        %v251 = vsel %vm238, %v210, -inf
        %252 = vmax.xlane.f32.xlu0 %v251
        %v253 = vpop.xlane.xlu0 %252
        %v254 = vsel %vm238, %v211, -inf
        %255 = vmax.xlane.f32.xlu0 %v254
        %v256 = vpop.xlane.xlu0 %255
        %v257 = vsel %vm238, %v212, -inf
        %258 = vmax.xlane.f32.xlu0 %v257
        %v259 = vpop.xlane.xlu0 %258
        %v260 = vsel %vm238, %v213, -inf
        %261 = vmax.xlane.f32.xlu0 %v260
        %v262 = vpop.xlane.xlu0 %261
        %v263 = vsel %vm238, %v214, -inf
        %264 = vmax.xlane.f32.xlu0 %v263
        %v265 = vpop.xlane.xlu0 %264
        %v266 = vsel %vm238, %v215, -inf
        %267 = vmax.xlane.f32.xlu0 %v266
        %v268 = vpop.xlane.xlu0 %267
        %v269 = vsel %vm238, %v216, -inf
        %270 = vmax.xlane.f32.xlu0 %v269
        %v271 = vpop.xlane.xlu0 %270
        %v272 = vsel %vm238, %v217, -inf
        %273 = vmax.xlane.f32.xlu0 %v272
        %v274 = vpop.xlane.xlu0 %273
        %v275 = vsel %vm238, %v218, -inf
        %276 = vmax.xlane.f32.xlu0 %v275
        %v277 = vpop.xlane.xlu0 %276
        %v278 = vsel %vm238, %v219, -inf
        %279 = vmax.xlane.f32.xlu0 %v278
        %v280 = vpop.xlane.xlu0 %279
        %v281 = vsel %vm238, %v220, -inf
        %282 = vmax.xlane.f32.xlu0 %v281
        %v283 = vpop.xlane.xlu0 %282
        %v284 = vsel %vm238, %v221, -inf
        %285 = vmax.xlane.f32.xlu0 %v284
        %v286 = vpop.xlane.xlu0 %285
        %v287 = vsub.f32 %v206, %v241
        %v288 = vsub.f32 %v207, %v244
        %v289 = vsub.f32 %v208, %v247
        %v290 = vsub.f32 %v209, %v250
        %v291 = vsub.f32 %v210, %v253
        %v292 = vsub.f32 %v211, %v256
        %v293 = vsub.f32 %v212, %v259
        %v294 = vsub.f32 %v213, %v262
        %v295 = vsub.f32 %v214, %v265
        %v296 = vsub.f32 %v215, %v268
        %v297 = vsub.f32 %v216, %v271
        %v298 = vsub.f32 %v217, %v274
        %v299 = vsub.f32 %v218, %v277
        %v300 = vsub.f32 %v219, %v280
        %v301 = vsub.f32 %v220, %v283
        %v302 = vsub.f32 %v221, %v286
        %v303 = vmul.f32 %v287, 1.442695
        %v304 = vpow.pop %v303
        %v305 = vmul.f32 %v288, 1.442695
        %v306 = vpow.pop %v305
        %v307 = vmul.f32 %v289, 1.442695
        %v308 = vpow.pop %v307
        %v309 = vmul.f32 %v290, 1.442695
        %v310 = vpow.pop %v309
        %v311 = vmul.f32 %v291, 1.442695
        %v312 = vpow.pop %v311
        %v313 = vmul.f32 %v292, 1.442695
        %v314 = vpow.pop %v313
        %v315 = vmul.f32 %v293, 1.442695
        %v316 = vpow.pop %v315
        %v317 = vmul.f32 %v294, 1.442695
        %v318 = vpow.pop %v317
        %v319 = vmul.f32 %v295, 1.442695
        %v320 = vpow.pop %v319
        %v321 = vmul.f32 %v296, 1.442695
        %v322 = vpow.pop %v321
        %v323 = vmul.f32 %v297, 1.442695
        %v324 = vpow.pop %v323
        %v325 = vmul.f32 %v298, 1.442695
        %v326 = vpow.pop %v325
        %v327 = vmul.f32 %v299, 1.442695
        %v328 = vpow.pop %v327
        %v329 = vmul.f32 %v300, 1.442695
        %v330 = vpow.pop %v329
        %v331 = vmul.f32 %v301, 1.442695
        %v332 = vpow.pop %v331
        %v333 = vmul.f32 %v302, 1.442695
        %v334 = vpow.pop %v333
        %v335 = vsel %vm238, %v304, 0.0
        %336 = vadd.xlane.f32.xlu0 %v335
        %v337 = vpop.xlane.xlu0 %336
        %v338 = vsel %vm238, %v306, 0.0
        %339 = vadd.xlane.f32.xlu0 %v338
        %v340 = vpop.xlane.xlu0 %339
        %v341 = vsel %vm238, %v308, 0.0
        %342 = vadd.xlane.f32.xlu0 %v341
        %v343 = vpop.xlane.xlu0 %342
        %v344 = vsel %vm238, %v310, 0.0
        %345 = vadd.xlane.f32.xlu0 %v344
        %v346 = vpop.xlane.xlu0 %345
        %v347 = vsel %vm238, %v312, 0.0
        %348 = vadd.xlane.f32.xlu0 %v347
        %v349 = vpop.xlane.xlu0 %348
        %v350 = vsel %vm238, %v314, 0.0
        %351 = vadd.xlane.f32.xlu0 %v350
        %v352 = vpop.xlane.xlu0 %351
        %v353 = vsel %vm238, %v316, 0.0
        %354 = vadd.xlane.f32.xlu0 %v353
        %v355 = vpop.xlane.xlu0 %354
        %v356 = vsel %vm238, %v318, 0.0
        %357 = vadd.xlane.f32.xlu0 %v356
        %v358 = vpop.xlane.xlu0 %357
        %v359 = vsel %vm238, %v320, 0.0
        %360 = vadd.xlane.f32.xlu0 %v359
        %v361 = vpop.xlane.xlu0 %360
        %v362 = vsel %vm238, %v322, 0.0
        %363 = vadd.xlane.f32.xlu0 %v362
        %v364 = vpop.xlane.xlu0 %363
        %v365 = vsel %vm238, %v324, 0.0
        %366 = vadd.xlane.f32.xlu0 %v365
        %v367 = vpop.xlane.xlu0 %366
        %v368 = vsel %vm238, %v326, 0.0
        %369 = vadd.xlane.f32.xlu0 %v368
        %v370 = vpop.xlane.xlu0 %369
        %v371 = vsel %vm238, %v328, 0.0
        %372 = vadd.xlane.f32.xlu0 %v371
        %v373 = vpop.xlane.xlu0 %372
        %v374 = vsel %vm238, %v330, 0.0
        %375 = vadd.xlane.f32.xlu0 %v374
        %v376 = vpop.xlane.xlu0 %375
        %v377 = vsel %vm238, %v332, 0.0
        %378 = vadd.xlane.f32.xlu0 %v377
        %v379 = vpop.xlane.xlu0 %378
        %v380 = vsel %vm238, %v334, 0.0
        %381 = vadd.xlane.f32.xlu0 %v380
        %v382 = vpop.xlane.xlu0 %381
        %v383 = vlog2.pop %v337
        %v384 = vmul.f32 %v383, 0.6931472
        %v385 = vlog2.pop %v340
        %v386 = vmul.f32 %v385, 0.6931472
        %v387 = vlog2.pop %v343
        %v388 = vmul.f32 %v387, 0.6931472
        %v389 = vlog2.pop %v346
        %v390 = vmul.f32 %v389, 0.6931472
        %v391 = vlog2.pop %v349
        %v392 = vmul.f32 %v391, 0.6931472
        %v393 = vlog2.pop %v352
        %v394 = vmul.f32 %v393, 0.6931472
        %v395 = vlog2.pop %v355
        %v396 = vmul.f32 %v395, 0.6931472
        %v397 = vlog2.pop %v358
        %v398 = vmul.f32 %v397, 0.6931472
        %v399 = vlog2.pop %v361
        %v400 = vmul.f32 %v399, 0.6931472
        %v401 = vlog2.pop %v364
        %v402 = vmul.f32 %v401, 0.6931472
        %v403 = vlog2.pop %v367
        %v404 = vmul.f32 %v403, 0.6931472
        %v405 = vlog2.pop %v370
        %v406 = vmul.f32 %v405, 0.6931472
        %v407 = vlog2.pop %v373
        %v408 = vmul.f32 %v407, 0.6931472
        %v409 = vlog2.pop %v376
        %v410 = vmul.f32 %v409, 0.6931472
        %v411 = vlog2.pop %v379
        %v412 = vmul.f32 %v411, 0.6931472
        %v413 = vlog2.pop %v382
        %v414 = vmul.f32 %v413, 0.6931472
        %v415 = vlaneseq
        %v416 = vand.u32 %v415, 127
        %417 = vset.pattern.permute.xlu0 0
        %418 = vperm.xlu0 %417, %v222
        %v419 = vpop.permute.xlu0 %418
        %420 = vset.pattern.permute.xlu0 0
        %421 = vperm.xlu0 %420, %v223
        %v422 = vpop.permute.xlu0 %421
        %423 = vset.pattern.permute.xlu0 0
        %424 = vperm.xlu0 %423, %v224
        %v425 = vpop.permute.xlu0 %424
        %426 = vset.pattern.permute.xlu0 0
        %427 = vperm.xlu0 %426, %v225
        %v428 = vpop.permute.xlu0 %427
        %429 = vset.pattern.permute.xlu0 0
        %430 = vperm.xlu0 %429, %v226
        %v431 = vpop.permute.xlu0 %430
        %432 = vset.pattern.permute.xlu0 0
        %433 = vperm.xlu0 %432, %v227
        %v434 = vpop.permute.xlu0 %433
        %435 = vset.pattern.permute.xlu0 0
        %436 = vperm.xlu0 %435, %v228
        %v437 = vpop.permute.xlu0 %436
        %438 = vset.pattern.permute.xlu0 0
        %439 = vperm.xlu0 %438, %v229
        %v440 = vpop.permute.xlu0 %439
        %441 = vset.pattern.permute.xlu0 0
        %442 = vperm.xlu0 %441, %v230
        %v443 = vpop.permute.xlu0 %442
        %444 = vset.pattern.permute.xlu0 0
        %445 = vperm.xlu0 %444, %v231
        %v446 = vpop.permute.xlu0 %445
        %447 = vset.pattern.permute.xlu0 0
        %448 = vperm.xlu0 %447, %v232
        %v449 = vpop.permute.xlu0 %448
        %450 = vset.pattern.permute.xlu0 0
        %451 = vperm.xlu0 %450, %v233
        %v452 = vpop.permute.xlu0 %451
        %453 = vset.pattern.permute.xlu0 0
        %454 = vperm.xlu0 %453, %v234
        %v455 = vpop.permute.xlu0 %454
        %456 = vset.pattern.permute.xlu0 0
        %457 = vperm.xlu0 %456, %v235
        %v458 = vpop.permute.xlu0 %457
        %459 = vset.pattern.permute.xlu0 0
        %460 = vperm.xlu0 %459, %v236
        %v461 = vpop.permute.xlu0 %460
        %462 = vset.pattern.permute.xlu0 0
        %463 = vperm.xlu0 %462, %v237
        %v464 = vpop.permute.xlu0 %463
        %vm465 = vcmp.eq.s32.totalorder %v416, %v419
        %vm466 = vcmp.eq.s32.totalorder %v416, %v422
        %vm467 = vcmp.eq.s32.totalorder %v416, %v425
        %vm468 = vcmp.eq.s32.totalorder %v416, %v428
        %vm469 = vcmp.eq.s32.totalorder %v416, %v431
        %vm470 = vcmp.eq.s32.totalorder %v416, %v434
        %vm471 = vcmp.eq.s32.totalorder %v416, %v437
        %vm472 = vcmp.eq.s32.totalorder %v416, %v440
        %vm473 = vcmp.eq.s32.totalorder %v416, %v443
        %vm474 = vcmp.eq.s32.totalorder %v416, %v446
        %vm475 = vcmp.eq.s32.totalorder %v416, %v449
        %vm476 = vcmp.eq.s32.totalorder %v416, %v452
        %vm477 = vcmp.eq.s32.totalorder %v416, %v455
        %vm478 = vcmp.eq.s32.totalorder %v416, %v458
        %vm479 = vcmp.eq.s32.totalorder %v416, %v461
        %vm480 = vcmp.eq.s32.totalorder %v416, %v464
        %v481 = vsel %vm465, %v287, 0.0
        %v482 = vsel %vm466, %v288, 0.0
        %v483 = vsel %vm467, %v289, 0.0
        %v484 = vsel %vm468, %v290, 0.0
        %v485 = vsel %vm469, %v291, 0.0
        %v486 = vsel %vm470, %v292, 0.0
        %v487 = vsel %vm471, %v293, 0.0
        %v488 = vsel %vm472, %v294, 0.0
        %v489 = vsel %vm473, %v295, 0.0
        %v490 = vsel %vm474, %v296, 0.0
        %v491 = vsel %vm475, %v297, 0.0
        %v492 = vsel %vm476, %v298, 0.0
        %v493 = vsel %vm477, %v299, 0.0
        %v494 = vsel %vm478, %v300, 0.0
        %v495 = vsel %vm479, %v301, 0.0
        %v496 = vsel %vm480, %v302, 0.0
        %v497 = vsel %vm238, %v481, 0.0
        %498 = vadd.xlane.f32.xlu0 %v497
        %v499 = vpop.xlane.xlu0 %498
        %v500 = vsel %vm238, %v482, 0.0
        %501 = vadd.xlane.f32.xlu0 %v500
        %v502 = vpop.xlane.xlu0 %501
        %v503 = vsel %vm238, %v483, 0.0
        %504 = vadd.xlane.f32.xlu0 %v503
        %v505 = vpop.xlane.xlu0 %504
        %v506 = vsel %vm238, %v484, 0.0
        %507 = vadd.xlane.f32.xlu0 %v506
        %v508 = vpop.xlane.xlu0 %507
        %v509 = vsel %vm238, %v485, 0.0
        %510 = vadd.xlane.f32.xlu0 %v509
        %v511 = vpop.xlane.xlu0 %510
        %v512 = vsel %vm238, %v486, 0.0
        %513 = vadd.xlane.f32.xlu0 %v512
        %v514 = vpop.xlane.xlu0 %513
        %v515 = vsel %vm238, %v487, 0.0
        %516 = vadd.xlane.f32.xlu0 %v515
        %v517 = vpop.xlane.xlu0 %516
        %v518 = vsel %vm238, %v488, 0.0
        %519 = vadd.xlane.f32.xlu0 %v518
        %v520 = vpop.xlane.xlu0 %519
        %v521 = vsel %vm238, %v489, 0.0
        %522 = vadd.xlane.f32.xlu0 %v521
        %v523 = vpop.xlane.xlu0 %522
        %v524 = vsel %vm238, %v490, 0.0
        %525 = vadd.xlane.f32.xlu0 %v524
        %v526 = vpop.xlane.xlu0 %525
        %v527 = vsel %vm238, %v491, 0.0
        %528 = vadd.xlane.f32.xlu0 %v527
        %v529 = vpop.xlane.xlu0 %528
        %v530 = vsel %vm238, %v492, 0.0
        %531 = vadd.xlane.f32.xlu0 %v530
        %v532 = vpop.xlane.xlu0 %531
        %v533 = vsel %vm238, %v493, 0.0
        %534 = vadd.xlane.f32.xlu0 %v533
        %v535 = vpop.xlane.xlu0 %534
        %v536 = vsel %vm238, %v494, 0.0
        %537 = vadd.xlane.f32.xlu0 %v536
        %v538 = vpop.xlane.xlu0 %537
        %v539 = vsel %vm238, %v495, 0.0
        %540 = vadd.xlane.f32.xlu0 %v539
        %v541 = vpop.xlane.xlu0 %540
        %v542 = vsel %vm238, %v496, 0.0
        %543 = vadd.xlane.f32.xlu0 %v542
        %v544 = vpop.xlane.xlu0 %543
        %v545 = vsub.f32 %v499, %v384
        %v546 = vsub.f32 %v502, %v386
        %v547 = vsub.f32 %v505, %v388
        %v548 = vsub.f32 %v508, %v390
        %v549 = vsub.f32 %v511, %v392
        %v550 = vsub.f32 %v514, %v394
        %v551 = vsub.f32 %v517, %v396
        %v552 = vsub.f32 %v520, %v398
        %v553 = vsub.f32 %v523, %v400
        %v554 = vsub.f32 %v526, %v402
        %v555 = vsub.f32 %v529, %v404
        %v556 = vsub.f32 %v532, %v406
        %v557 = vsub.f32 %v535, %v408
        %v558 = vsub.f32 %v538, %v410
        %v559 = vsub.f32 %v541, %v412
        %v560 = vsub.f32 %v544, %v414
        %v561 = vmul.f32 %v545, 1.442695
        %v562 = vpow.pop %v561
        %v563 = vmul.f32 %v546, 1.442695
        %v564 = vpow.pop %v563
        %v565 = vmul.f32 %v547, 1.442695
        %v566 = vpow.pop %v565
        %v567 = vmul.f32 %v548, 1.442695
        %v568 = vpow.pop %v567
        %v569 = vmul.f32 %v549, 1.442695
        %v570 = vpow.pop %v569
        %v571 = vmul.f32 %v550, 1.442695
        %v572 = vpow.pop %v571
        %v573 = vmul.f32 %v551, 1.442695
        %v574 = vpow.pop %v573
        %v575 = vmul.f32 %v552, 1.442695
        %v576 = vpow.pop %v575
        %v577 = vmul.f32 %v553, 1.442695
        %v578 = vpow.pop %v577
        %v579 = vmul.f32 %v554, 1.442695
        %v580 = vpow.pop %v579
        %v581 = vmul.f32 %v555, 1.442695
        %v582 = vpow.pop %v581
        %v583 = vmul.f32 %v556, 1.442695
        %v584 = vpow.pop %v583
        %v585 = vmul.f32 %v557, 1.442695
        %v586 = vpow.pop %v585
        %v587 = vmul.f32 %v558, 1.442695
        %v588 = vpow.pop %v587
        %v589 = vmul.f32 %v559, 1.442695
        %v590 = vpow.pop %v589
        %v591 = vmul.f32 %v560, 1.442695
        %v592 = vpow.pop %v591
        %vm593 = vcmp.gt.s32.totalorder %v222, 0
        %vm594 = vcmp.gt.s32.totalorder %v223, 0
        %vm595 = vcmp.gt.s32.totalorder %v224, 0
        %vm596 = vcmp.gt.s32.totalorder %v225, 0
        %vm597 = vcmp.gt.s32.totalorder %v226, 0
        %vm598 = vcmp.gt.s32.totalorder %v227, 0
        %vm599 = vcmp.gt.s32.totalorder %v228, 0
        %vm600 = vcmp.gt.s32.totalorder %v229, 0
        %vm601 = vcmp.gt.s32.totalorder %v230, 0
        %vm602 = vcmp.gt.s32.totalorder %v231, 0
        %vm603 = vcmp.gt.s32.totalorder %v232, 0
        %vm604 = vcmp.gt.s32.totalorder %v233, 0
        %vm605 = vcmp.gt.s32.totalorder %v234, 0
        %vm606 = vcmp.gt.s32.totalorder %v235, 0
        %vm607 = vcmp.gt.s32.totalorder %v236, 0
        %vm608 = vcmp.gt.s32.totalorder %v237, 0
        %v609 = vsel %vm593, 0.25, 0.75
        %v610 = vsel %vm594, 0.25, 0.75
        %v611 = vsel %vm595, 0.25, 0.75
        %v612 = vsel %vm596, 0.25, 0.75
        %v613 = vsel %vm597, 0.25, 0.75
        %v614 = vsel %vm598, 0.25, 0.75
        %v615 = vsel %vm599, 0.25, 0.75
        %v616 = vsel %vm600, 0.25, 0.75
        %v617 = vsel %vm601, 0.25, 0.75
        %v618 = vsel %vm602, 0.25, 0.75
        %v619 = vsel %vm603, 0.25, 0.75
        %v620 = vsel %vm604, 0.25, 0.75
        %v621 = vsel %vm605, 0.25, 0.75
        %v622 = vsel %vm606, 0.25, 0.75
        %v623 = vsel %vm607, 0.25, 0.75
        %v624 = vsel %vm608, 0.25, 0.75
        %v625 = vmul.f32 %v545, %v609
        %v626 = vmul.f32 %v546, %v610
        %v627 = vmul.f32 %v547, %v611
        %v628 = vmul.f32 %v548, %v612
        %v629 = vmul.f32 %v549, %v613
        %v630 = vmul.f32 %v550, %v614
        %v631 = vmul.f32 %v551, %v615
        %v632 = vmul.f32 %v552, %v616
        %v633 = vmul.f32 %v553, %v617
        %v634 = vmul.f32 %v554, %v618
        %v635 = vmul.f32 %v555, %v619
        %v636 = vmul.f32 %v556, %v620
        %v637 = vmul.f32 %v557, %v621
        %v638 = vmul.f32 %v558, %v622
        %v639 = vmul.f32 %v559, %v623
        %v640 = vmul.f32 %v560, %v624
        %v641 = vsub.f32 1.0, %v562
        %v642 = vsub.f32 1.0, %v564
        %v643 = vsub.f32 1.0, %v566
        %v644 = vsub.f32 1.0, %v568
        %v645 = vsub.f32 1.0, %v570
        %v646 = vsub.f32 1.0, %v572
        %v647 = vsub.f32 1.0, %v574
        %v648 = vsub.f32 1.0, %v576
        %v649 = vsub.f32 1.0, %v578
        %v650 = vsub.f32 1.0, %v580
        %v651 = vsub.f32 1.0, %v582
        %v652 = vsub.f32 1.0, %v584
        %v653 = vsub.f32 1.0, %v586
        %v654 = vsub.f32 1.0, %v588
        %v655 = vsub.f32 1.0, %v590
        %v656 = vsub.f32 1.0, %v592
        %v657 = vmul.f32 %v641, %v641
        %v658 = vmul.f32 %v642, %v642
        %v659 = vmul.f32 %v643, %v643
        %v660 = vmul.f32 %v644, %v644
        %v661 = vmul.f32 %v645, %v645
        %v662 = vmul.f32 %v646, %v646
        %v663 = vmul.f32 %v647, %v647
        %v664 = vmul.f32 %v648, %v648
        %v665 = vmul.f32 %v649, %v649
        %v666 = vmul.f32 %v650, %v650
        %v667 = vmul.f32 %v651, %v651
        %v668 = vmul.f32 %v652, %v652
        %v669 = vmul.f32 %v653, %v653
        %v670 = vmul.f32 %v654, %v654
        %v671 = vmul.f32 %v655, %v655
        %v672 = vmul.f32 %v656, %v656
        %v673 = vsub.f32 0.0, %v657
        %v674 = vsub.f32 0.0, %v658
        %v675 = vsub.f32 0.0, %v659
        %v676 = vsub.f32 0.0, %v660
        %v677 = vsub.f32 0.0, %v661
        %v678 = vsub.f32 0.0, %v662
        %v679 = vsub.f32 0.0, %v663
        %v680 = vsub.f32 0.0, %v664
        %v681 = vsub.f32 0.0, %v665
        %v682 = vsub.f32 0.0, %v666
        %v683 = vsub.f32 0.0, %v667
        %v684 = vsub.f32 0.0, %v668
        %v685 = vsub.f32 0.0, %v669
        %v686 = vsub.f32 0.0, %v670
        %v687 = vsub.f32 0.0, %v671
        %v688 = vsub.f32 0.0, %v672
        %v689 = vmul.f32 %v673, %v625
        %v690 = vmul.f32 %v674, %v626
        %v691 = vmul.f32 %v675, %v627
        %v692 = vmul.f32 %v676, %v628
        %v693 = vmul.f32 %v677, %v629
        %v694 = vmul.f32 %v678, %v630
        %v695 = vmul.f32 %v679, %v631
        %v696 = vmul.f32 %v680, %v632
        %v697 = vmul.f32 %v681, %v633
        %v698 = vmul.f32 %v682, %v634
        %v699 = vmul.f32 %v683, %v635
        %v700 = vmul.f32 %v684, %v636
        %v701 = vmul.f32 %v685, %v637
        %v702 = vmul.f32 %v686, %v638
        %v703 = vmul.f32 %v687, %v639
        %v704 = vmul.f32 %v688, %v640
        %s705 = smul.u32 %s16, 128
        %v706 = vlaneseq
        %v707 = vshrl.u32 %v706, 7
        %v708 = vadd.s32 %v707, 8
        %v709 = vadd.s32 %v707, 16
        %v710 = vadd.s32 %v707, 24
        %v711 = vadd.s32 %v707, 32
        %v712 = vadd.s32 %v707, 40
        %v713 = vadd.s32 %v707, 48
        %v714 = vadd.s32 %v707, 56
        %v715 = vadd.s32 %v707, 64
        %v716 = vadd.s32 %v707, 72
        %v717 = vadd.s32 %v707, 80
        %v718 = vadd.s32 %v707, 88
        %v719 = vadd.s32 %v707, 96
        %v720 = vadd.s32 %v707, 104
        %v721 = vadd.s32 %v707, 112
        %v722 = vadd.s32 %v707, 120
        %v723 = vstv %s705
        %v724 = vadd.s32 %v723, %v707
        %v725 = vadd.s32 %v723, %v708
        %v726 = vadd.s32 %v723, %v709
        %v727 = vadd.s32 %v723, %v710
        %v728 = vadd.s32 %v723, %v711
        %v729 = vadd.s32 %v723, %v712
        %v730 = vadd.s32 %v723, %v713
        %v731 = vadd.s32 %v723, %v714
        %v732 = vadd.s32 %v723, %v715
        %v733 = vadd.s32 %v723, %v716
        %v734 = vadd.s32 %v723, %v717
        %v735 = vadd.s32 %v723, %v718
        %v736 = vadd.s32 %v723, %v719
        %v737 = vadd.s32 %v723, %v720
        %v738 = vadd.s32 %v723, %v721
        %v739 = vadd.s32 %v723, %v722
        %vm740 = vcmp.lt.s32.totalorder %v724, 300
        %vm741 = vcmp.lt.s32.totalorder %v725, 300
        %vm742 = vcmp.lt.s32.totalorder %v726, 300
        %vm743 = vcmp.lt.s32.totalorder %v727, 300
        %vm744 = vcmp.lt.s32.totalorder %v728, 300
        %vm745 = vcmp.lt.s32.totalorder %v729, 300
        %vm746 = vcmp.lt.s32.totalorder %v730, 300
        %vm747 = vcmp.lt.s32.totalorder %v731, 300
        %vm748 = vcmp.lt.s32.totalorder %v732, 300
        %vm749 = vcmp.lt.s32.totalorder %v733, 300
        %vm750 = vcmp.lt.s32.totalorder %v734, 300
        %vm751 = vcmp.lt.s32.totalorder %v735, 300
        %vm752 = vcmp.lt.s32.totalorder %v736, 300
        %vm753 = vcmp.lt.s32.totalorder %v737, 300
        %vm754 = vcmp.lt.s32.totalorder %v738, 300
        %vm755 = vcmp.lt.s32.totalorder %v739, 300
        %v756 = vsel %vm740, %v689, 0.0
        %v757 = vsel %vm741, %v690, 0.0
        %v758 = vsel %vm742, %v691, 0.0
        %v759 = vsel %vm743, %v692, 0.0
        %v760 = vsel %vm744, %v693, 0.0
        %v761 = vsel %vm745, %v694, 0.0
        %v762 = vsel %vm746, %v695, 0.0
        %v763 = vsel %vm747, %v696, 0.0
        %v764 = vsel %vm748, %v697, 0.0
        %v765 = vsel %vm749, %v698, 0.0
        %v766 = vsel %vm750, %v699, 0.0
        %v767 = vsel %vm751, %v700, 0.0
        %v768 = vsel %vm752, %v701, 0.0
        %v769 = vsel %vm753, %v702, 0.0
        %v770 = vsel %vm754, %v703, 0.0
        %v771 = vsel %vm755, %v704, 0.0
        %vm772 = vcmask 7168
        %v773 = vsel %vm772, %v756, 0.0
        %v774 = vsel %vm772, %v757, 0.0
        %v775 = vadd.f32 %v773, %v774
        %v776 = vsel %vm772, %v758, 0.0
        %v777 = vadd.f32 %v775, %v776
        %v778 = vsel %vm772, %v759, 0.0
        %v779 = vadd.f32 %v777, %v778
        %v780 = vsel %vm772, %v760, 0.0
        %v781 = vadd.f32 %v779, %v780
        %v782 = vsel %vm772, %v761, 0.0
        %v783 = vadd.f32 %v781, %v782
        %v784 = vsel %vm772, %v762, 0.0
        %v785 = vadd.f32 %v783, %v784
        %v786 = vsel %vm772, %v763, 0.0
        %v787 = vadd.f32 %v785, %v786
        %v788 = vsel %vm772, %v764, 0.0
        %v789 = vadd.f32 %v787, %v788
        %v790 = vsel %vm772, %v765, 0.0
        %v791 = vadd.f32 %v789, %v790
        %v792 = vsel %vm772, %v766, 0.0
        %v793 = vadd.f32 %v791, %v792
        %v794 = vsel %vm772, %v767, 0.0
        %v795 = vadd.f32 %v793, %v794
        %v796 = vsel %vm772, %v768, 0.0
        %v797 = vadd.f32 %v795, %v796
        %v798 = vsel %vm772, %v769, 0.0
        %v799 = vadd.f32 %v797, %v798
        %v800 = vsel %vm772, %v770, 0.0
        %v801 = vadd.f32 %v799, %v800
        %v802 = vsel %vm772, %v771, 0.0
        %v803 = vadd.f32 %v801, %v802
        %804 = vadd.xlane.f32.xlu0 %v803
        %v805 = vpop.xlane.xlu0 %804
        %v806 = vrot.slane %v805, 4
        %v807 = vadd.f32 %v805, %v806
        %v808 = vrot.slane %v807, 2
        %v809 = vadd.f32 %v807, %v808
        %v810 = vrot.slane %v809, 1
        %v811 = vadd.f32 %v809, %v810
        %s812 = vtos %v811
        %v813 = vstv %s812
        %814 = vst [vmem:[%s177] sm:$0xff] %v813
        %s815 = sand.u32 %s76, 1
        %s816 = scalar_lea.sflag [#allocation3], %s815
        %s817 = sand.u32 %s76, 1
        %s818 = smul.addr %s817, 8
        %s819 = scalar_lea.vmem [#allocation2], %s818
        // Predicated region
        $region29: #{tpu_custom_call.1} parent=27 // pred_check
          %p820 = pneg %p86
        $region30: #{tpu_custom_call.1} parent=27 // pred_check_branch
          %822 = sbr.rel (%p820) target = $region32
        $region31: #{tpu_custom_call.1} parent=27 // pred_region
          %824 = vsyncadd %s816, 0
          %s825 = smul.addr %s16, 8
          %s826 = scalar_lea.hbm %s2, %s825
          %s828 = sshll.u32 %s819, 4
          %s829 = int_to_ptr.vmem [resolvable:$true] %s828
          %s830 = sshll.u32 %s826, 4
          %s831 = int_to_ptr.hbm [resolvable:$true] %s830
          %833 = dma.vmem_to_hbm [thread:$0]  %s829, 128, %s831, %s816
        $region32: #{tpu_custom_call.1} parent=27 // pred_fallthru
          _
      $region28: #{tpu_custom_call.1} parent=5 // pred_fallthru
        _
      %p834 = scmp.le.s32.totalorder 2, %s11
      // Predicated region
      $region33: #{tpu_custom_call.1} parent=5 // pred_check
        %p835 = pneg %p834
      $region34: #{tpu_custom_call.1} parent=5 // pred_check_branch
        %837 = sbr.rel (%p835) target = $region36
      $region35: #{tpu_custom_call.1} parent=5 // pred_region
        %s838 = ssub.s32 %s11, 2
        // Predicated region
        $region37: #{tpu_custom_call.1} parent=35 // pred_check
          %p839 = pneg %p92
        $region38: #{tpu_custom_call.1} parent=35 // pred_check_branch
          %841 = sbr.rel (%p839) target = $region40
        $region39: #{tpu_custom_call.1} parent=35 // pred_region
          %s842 = sand.u32 %s77, 1
          %s843 = scalar_lea.sflag [#allocation3], %s842
          %s844 = sand.u32 %s77, 1
          %s845 = smul.addr %s844, 8
          %s846 = scalar_lea.vmem [#allocation2], %s845
          %848 = dma.done %s843, 128
        $region40: #{tpu_custom_call.1} parent=35 // pred_fallthru
          _
      $region36: #{tpu_custom_call.1} parent=5 // pred_fallthru
        _
    $region6: #{tpu_custom_call.1} parent=1 // loop_footer
      %s15 = sadd.s32 1, %s11
    $region7: #{tpu_custom_call.1} parent=1 // loop_footer_branch
      %10 = sbr.rel target = $region3
    $region8: #{tpu_custom_call.1} parent=1 // loop_exit
      _
    %849 = vsyncpa [#allocation3], 1
    %s850 = scalar_lea.sflag [#allocation3], 1
    %851 = vsyncpa %s850, 1

</llo_original>
